<compile_context>
chip_gen: v7x
topology: tpu7x:2x2x1
jax: 0.10.0
libtpu: 0.0.40
codegen_flags: <defaults>
</compile_context>

<pallas_src>
import functools

import jax
import jax.numpy as jnp
from jax.experimental import pallas as pl
from jax.experimental.pallas import tpu as pltpu


LOG_STD_MIN = -20.0
LOG_STD_MAX = 2.0

# Slab section row alignment: 16 sublanes keeps every static slice tile-aligned
# for both f32 (8,128) and bf16 (16,128) layouts (free views, no layout copies).
_ROW_ALIGN = 16


def _round_up(x, m):
    return ((x + m - 1) // m) * m


def _cdiv(a, b):
    return -(-a // b)


def _slab_layout(S, H, A):
    """Row offsets for the packed parameter slab.

    Slab is [R, L], L = lane width (>= max(H, 2A), multiple of 128).  Every
    section starts at a multiple-of-16 row so in-kernel slices are tile
    aligned.  w2 / head sections carry L rows (zero-padded past H) so the
    contraction dims match the L-lane-wide activations with no lane slicing.
    """
    L = _round_up(max(H, 2 * A), 128)
    a = _ROW_ALIGN
    off_w1 = 0                       # [S, L]  valid cols [0:H]
    off_b1 = _round_up(S, a)         # row 0   valid cols [0:H]
    off_w2 = off_b1 + a              # [L, L]  valid [0:H, 0:H]
    off_b2 = off_w2 + L              # row 0   valid cols [0:H]
    off_wh = off_b2 + a              # [L, L]  valid [0:H, 0:2A] (mu | log_std)
    off_bh = off_wh + L              # row 0   valid cols [0:2A]
    R = off_bh + a
    return L, R, (off_w1, off_b1, off_w2, off_b2, off_wh, off_bh)


def _actor_kernel(x_ref, slab_ref, out_ref, *, S, A, L, out_rows, offs):
    """Whole Actor MLP forward for one batch tile.

    x:    [TB, S]        f32
    slab: [R, L]         packed parameters (any float dtype; upcast to f32)
    out:  [out_rows, TB] f32 TRANSPOSED heads; rows [0:A] = mu,
          rows [A:2A] = clamped log_std, remaining rows are zero padding.
    """
    off_w1, off_b1, off_w2, off_b2, off_wh, off_bh = offs

    x = x_ref[...]                                            # [TB, S] f32

    # Layer 1: Linear(S -> H) + ReLU (zero padding keeps lanes [H:L] at 0).
    w1 = slab_ref[off_w1:off_w1 + S, :].astype(jnp.float32)   # [S, L]
    b1 = slab_ref[off_b1:off_b1 + 1, :].astype(jnp.float32)   # [1, L]
    h1 = jnp.maximum(
        jnp.dot(x, w1, preferred_element_type=jnp.float32) + b1, 0.0)

    # Layer 2: Linear(H -> H) + ReLU.
    w2 = slab_ref[off_w2:off_w2 + L, :].astype(jnp.float32)   # [L, L]
    b2 = slab_ref[off_b2:off_b2 + 1, :].astype(jnp.float32)   # [1, L]
    h2 = jnp.maximum(
        jnp.dot(h1, w2, preferred_element_type=jnp.float32) + b2, 0.0)

    # Fused heads: one matmul produces [mu | log_std] in the first 2A lanes.
    wh = slab_ref[off_wh:off_wh + L, :].astype(jnp.float32)   # [L, L]
    bh = slab_ref[off_bh:off_bh + 1, :].astype(jnp.float32)   # [1, L]
    heads = jnp.dot(h2, wh, preferred_element_type=jnp.float32) + bh  # [TB, L]

    # Clamp only the log_std lanes [A:2A]; mu lanes pass through untouched.
    lane = jax.lax.broadcasted_iota(jnp.int32, heads.shape, 1)
    is_log_std = jnp.logical_and(lane >= A, lane < 2 * A)
    heads = jnp.where(is_log_std,
                      jnp.clip(heads, LOG_STD_MIN, LOG_STD_MAX), heads)

    # Transposed lane-dense store: only out_rows (= round_up(2A, 8)) rows are
    # written instead of a [TB, L] slab -> ~L/out_rows (16x at A=4) fewer
    # output HBM bytes.  The [TB, L] -> [L, TB] transpose uses the idle XLU.
    heads_t = heads.T                                          # [L, TB]
    out_ref[...] = heads_t[:out_rows, :]                       # [out_rows, TB]


@functools.partial(jax.jit, static_argnames=("hidden_size", "action_size"))
def actor_forward(state, slab, *, hidden_size, action_size):
    """Runs the fused Actor forward Pallas kernel.

    state: [B, S] float32
    slab:  packed parameter slab from pack_actor_params()
    returns (mu [B, A], log_std [B, A]) with log_std clamped.
    """
    B, S = state.shape
    H, A = hidden_size, action_size
    L, R, offs = _slab_layout(S, H, A)
    assert slab.shape == (R, L), (slab.shape, (R, L))
    out_rows = _round_up(2 * A, 8)

    # ---- batch tiling ----
    if B < 256:
        # Single grid step.  Only tiny/ragged batches get a (negligible) pad
        # so the one block matches the array exactly.
        TB = _round_up(max(B, 8), 8)
        if TB != B:
            state = jnp.pad(state, ((0, TB - B), (0, 0)))
        nb = 1
    else:
        # >= 2 tiles so the "parallel" batch axis engages both TensorCores on
        # v7x; TB multiple of 128 keeps the transposed output store unmasked.
        # 512 rows is the measured overhead/DMA sweet spot (sweepable).
        TB = min(512, _round_up(_cdiv(B, 2), 128))
        nb = _cdiv(B, TB)          # no wrapper pad: ragged last block is fine
    B_out = nb * TB

    itemsize = jnp.dtype(slab.dtype).itemsize

    # Explicit VMEM budget from the actual tiles (state/out double-buffered,
    # resident slab, f32 intermediates), floored at the default scoped limit.
    # TODO(synk): pipeline_mode=pl.Buffered(1) on the slab spec would drop its
    # second buffer for very large hidden sizes on v7x's 64 MiB VMEM.
    tile_bytes = (2 * TB * S * 4
                  + 2 * out_rows * TB * 4
                  + 2 * R * L * itemsize
                  + 6 * TB * L * 4)
    vmem_limit = int(min(max(tile_bytes + (4 << 20), 32 << 20), 64 << 20))

    # True (un-padded) work, not padded-L figures.
    flops = 2 * B * (S * H + H * H + H * 2 * A)
    bytes_accessed = int(B * S * 4 + R * L * itemsize + 2 * A * B * 4)

    out = pl.pallas_call(
        functools.partial(_actor_kernel, S=S, A=A, L=L,
                          out_rows=out_rows, offs=offs),
        out_shape=jax.ShapeDtypeStruct((out_rows, B_out), jnp.float32),
        grid=(nb,),
        in_specs=[
            pl.BlockSpec((TB, S), lambda i: (i, 0)),   # state tile, streamed
            pl.BlockSpec((R, L), lambda i: (0, 0)),    # parameter slab, resident
        ],
        out_specs=pl.BlockSpec((out_rows, TB), lambda i: (0, i)),
        compiler_params=pltpu.CompilerParams(
            dimension_semantics=("parallel",),
            vmem_limit_bytes=vmem_limit),
        cost_estimate=pl.CostEstimate(
            flops=flops, transcendentals=0, bytes_accessed=bytes_accessed),
    )(state, slab)

    mu = out[:A, :B].T                 # [B, A]
    log_std = out[A:2 * A, :B].T       # [B, A]
    return mu, log_std


def init_actor_params(key, state_size, hidden_size, action_size):
    """Deterministic PyTorch-style init: U(-1/sqrt(fan_in), 1/sqrt(fan_in)).

    Weights stored as [in_features, out_features]; biases as [1, out_features].
    """
    def linear(k, fan_in, fan_out):
        kw, kb = jax.random.split(k)
        bound = 1.0 / jnp.sqrt(jnp.float32(fan_in))
        w = jax.random.uniform(kw, (fan_in, fan_out), jnp.float32, -bound, bound)
        b = jax.random.uniform(kb, (1, fan_out), jnp.float32, -bound, bound)
        return w, b

    k1, k2, k3, k4 = jax.random.split(key, 4)
    w1, b1 = linear(k1, state_size, hidden_size)
    w2, b2 = linear(k2, hidden_size, hidden_size)
    w_mu, b_mu = linear(k3, hidden_size, action_size)
    w_ls, b_ls = linear(k4, hidden_size, action_size)
    return dict(w1=w1, b1=b1, w2=w2, b2=b2,
                w_mu=w_mu, b_mu=b_mu, w_ls=w_ls, b_ls=b_ls)


def pack_actor_params(params, state_size, hidden_size, action_size,
                      dtype=jnp.bfloat16):
    """Packs all Actor parameters into one zero-padded [R, L] slab.

    Done once at init time; the kernel reads sub-weights with static,
    tile-aligned slices.  Heads are fused column-wise: lanes [0:A] = mu,
    [A:2A] = log_std.  Stored in bf16 by default (halves HBM/VMEM traffic;
    the kernel upcasts and accumulates in f32).
    """
    S, H, A = state_size, hidden_size, action_size
    L, R, (off_w1, off_b1, off_w2, off_b2, off_wh, off_bh) = _slab_layout(S, H, A)

    slab = jnp.zeros((R, L), jnp.float32)
    slab = slab.at[off_w1:off_w1 + S, :H].set(params["w1"])
    slab = slab.at[off_b1, :H].set(params["b1"].reshape(-1))
    slab = slab.at[off_w2:off_w2 + H, :H].set(params["w2"])
    slab = slab.at[off_b2, :H].set(params["b2"].reshape(-1))

    w_heads = jnp.concatenate([params["w_mu"], params["w_ls"]], axis=1)  # [H, 2A]
    b_heads = jnp.concatenate([params["b_mu"], params["b_ls"]], axis=1)  # [1, 2A]
    slab = slab.at[off_wh:off_wh + H, :2 * A].set(w_heads)
    slab = slab.at[off_bh, :2 * A].set(b_heads.reshape(-1))
    return slab.astype(dtype)


def _reference_forward(state, p, precision=jax.lax.Precision.HIGHEST):
    """Pure-JAX reference mirroring the PyTorch Actor.forward semantics."""
    dot = lambda a, b: jnp.dot(a, b, precision=precision)
    h = jnp.maximum(dot(state, p["w1"]) + p["b1"], 0.0)
    h = jnp.maximum(dot(h, p["w2"]) + p["b2"], 0.0)
    mu = dot(h, p["w_mu"]) + p["b_mu"]
    log_std = jnp.clip(dot(h, p["w_ls"]) + p["b_ls"], LOG_STD_MIN, LOG_STD_MAX)
    return mu, log_std


# TODO(synk): evaluate()/get_action() sampling (Normal.rsample, tanh, log_prob)
# is host-side distribution logic, not part of forward(); implement in plain JAX.


if __name__ == "__main__":
    # Small shapes consistent with the module: batch=8, state=16, hidden=32, action=4.
    B, S, H, A = 8, 16, 32, 4

    key = jax.random.PRNGKey(0)
    k_params, k_state = jax.random.split(key)
    params = init_actor_params(k_params, S, H, A)
    slab = pack_actor_params(params, S, H, A)              # bf16 packed slab
    state = jax.random.normal(k_state, (B, S), jnp.float32)

    mu, log_std = actor_forward(state, slab, hidden_size=H, action_size=A)
    jax.block_until_ready((mu, log_std))

    assert mu.shape == (B, A) and log_std.shape == (B, A)

    # Check against a reference using the SAME bf16-rounded parameters
    # (isolates kernel structure from weight-storage rounding).
    p_bf16 = {k: v.astype(jnp.bfloat16).astype(jnp.float32)
              for k, v in params.items()}
    mu_ref, ls_ref = _reference_forward(state, p_bf16)
    assert jnp.allclose(mu, mu_ref, atol=5e-2, rtol=5e-2)
    assert jnp.allclose(log_std, ls_ref, atol=5e-2, rtol=5e-2)

    # Loose sanity check against the full-f32 reference (bf16 rounding only).
    mu32, ls32 = _reference_forward(state, params)
    assert jnp.allclose(mu, mu32, atol=1e-1, rtol=1e-1)
    assert jnp.allclose(log_std, ls32, atol=1e-1, rtol=1e-1)

    print("KERNEL_OK")
</pallas_src>

<mosaic_0001>
module attributes {stable_mosaic.version = 11 : i64} {
  func.func @_actor_kernel(%arg0: i32, %arg1: memref<8x16xf32, #tpu.memory_space<vmem>>, %arg2: memref<320x128xbf16, #tpu.memory_space<vmem>>, %arg3: memref<8x8xf32, #tpu.memory_space<vmem>>) attributes {dimension_semantics = [#tpu.dimension_semantics<parallel>], iteration_bounds = array<i64: 1>, scalar_prefetch = 0 : i64, scratch_operands = 0 : i64, tpu.core_type = #tpu.core_type<tc>, window_params = [{transform_indices = @transform_0, window_bounds = array<i64: 8, 16>}, {pipeline_mode = #tpu.pipeline_mode<synchronous>, transform_indices = @transform_1, window_bounds = array<i64: 320, 128>}, {transform_indices = @transform_2, window_bounds = array<i64: 8, 8>}]} {
    %c0 = arith.constant 0 : index
    %c0_0 = arith.constant 0 : index
    %0 = vector.load %arg1[%c0, %c0_0] : memref<8x16xf32, #tpu.memory_space<vmem>>, vector<8x16xf32>
    %c0_1 = arith.constant 0 : index
    %c0_2 = arith.constant 0 : index
    %1 = vector.load %arg2[%c0_1, %c0_2] : memref<320x128xbf16, #tpu.memory_space<vmem>>, vector<16x128xbf16>
    %2 = arith.extf %1 : vector<16x128xbf16> to vector<16x128xf32>
    %c16 = arith.constant 16 : index
    %c0_3 = arith.constant 0 : index
    %3 = vector.load %arg2[%c16, %c0_3] : memref<320x128xbf16, #tpu.memory_space<vmem>>, vector<1x128xbf16>
    %4 = arith.extf %3 : vector<1x128xbf16> to vector<1x128xf32>
    %cst = arith.constant dense<0.000000e+00> : vector<8x128xf32>
    %5 = tpu.matmul %0, %2, %cst {dimension_numbers = #tpu.dot_dimension_numbers<[1], [0], [0], [1], [0, 0, 1, 1], [], []>} : vector<8x16xf32>, vector<16x128xf32>, vector<8x128xf32> -> vector<8x128xf32>
    %6 = vector.broadcast %4 : vector<1x128xf32> to vector<8x128xf32>
    %7 = arith.addf %5, %6 : vector<8x128xf32>
    %cst_4 = arith.constant 0.000000e+00 : f32
    %8 = vector.broadcast %cst_4 : f32 to vector<8x128xf32>
    %9 = arith.maximumf %7, %8 : vector<8x128xf32>
    %c32 = arith.constant 32 : index
    %c0_5 = arith.constant 0 : index
    %10 = vector.load %arg2[%c32, %c0_5] : memref<320x128xbf16, #tpu.memory_space<vmem>>, vector<128x128xbf16>
    %11 = arith.extf %10 : vector<128x128xbf16> to vector<128x128xf32>
    %c160 = arith.constant 160 : index
    %c0_6 = arith.constant 0 : index
    %12 = vector.load %arg2[%c160, %c0_6] : memref<320x128xbf16, #tpu.memory_space<vmem>>, vector<1x128xbf16>
    %13 = arith.extf %12 : vector<1x128xbf16> to vector<1x128xf32>
    %cst_7 = arith.constant dense<0.000000e+00> : vector<8x128xf32>
    %14 = tpu.matmul %9, %11, %cst_7 {dimension_numbers = #tpu.dot_dimension_numbers<[1], [0], [0], [1], [0, 0, 1, 1], [], []>} : vector<8x128xf32>, vector<128x128xf32>, vector<8x128xf32> -> vector<8x128xf32>
    %15 = vector.broadcast %13 : vector<1x128xf32> to vector<8x128xf32>
    %16 = arith.addf %14, %15 : vector<8x128xf32>
    %cst_8 = arith.constant 0.000000e+00 : f32
    %17 = vector.broadcast %cst_8 : f32 to vector<8x128xf32>
    %18 = arith.maximumf %16, %17 : vector<8x128xf32>
    %c176 = arith.constant 176 : index
    %c0_9 = arith.constant 0 : index
    %19 = vector.load %arg2[%c176, %c0_9] : memref<320x128xbf16, #tpu.memory_space<vmem>>, vector<128x128xbf16>
    %20 = arith.extf %19 : vector<128x128xbf16> to vector<128x128xf32>
    %c304 = arith.constant 304 : index
    %c0_10 = arith.constant 0 : index
    %21 = vector.load %arg2[%c304, %c0_10] : memref<320x128xbf16, #tpu.memory_space<vmem>>, vector<1x128xbf16>
    %22 = arith.extf %21 : vector<1x128xbf16> to vector<1x128xf32>
    %cst_11 = arith.constant dense<0.000000e+00> : vector<8x128xf32>
    %23 = tpu.matmul %18, %20, %cst_11 {dimension_numbers = #tpu.dot_dimension_numbers<[1], [0], [0], [1], [0, 0, 1, 1], [], []>} : vector<8x128xf32>, vector<128x128xf32>, vector<8x128xf32> -> vector<8x128xf32>
    %24 = vector.broadcast %22 : vector<1x128xf32> to vector<8x128xf32>
    %25 = arith.addf %23, %24 : vector<8x128xf32>
    %26 = tpu.iota {dimensions = array<i32: 1>} : vector<8x128xi32>
    %c4_i32 = arith.constant 4 : i32
    %27 = vector.broadcast %c4_i32 : i32 to vector<8x128xi32>
    %28 = arith.cmpi sge, %26, %27 : vector<8x128xi32>
    %c8_i32 = arith.constant 8 : i32
    %29 = vector.broadcast %c8_i32 : i32 to vector<8x128xi32>
    %30 = arith.cmpi slt, %26, %29 : vector<8x128xi32>
    %31 = arith.andi %28, %30 : vector<8x128xi1>
    %cst_12 = arith.constant -2.000000e+01 : f32
    %cst_13 = arith.constant 2.000000e+00 : f32
    %32 = vector.broadcast %cst_12 : f32 to vector<8x128xf32>
    %33 = arith.maximumf %32, %25 : vector<8x128xf32>
    %34 = vector.broadcast %cst_13 : f32 to vector<8x128xf32>
    %35 = arith.minimumf %34, %33 : vector<8x128xf32>
    %36 = arith.select %31, %35, %25 : vector<8x128xi1>, vector<8x128xf32>
    %37 = tpu.transpose %36, [1, 0] : vector<8x128xf32> -> vector<128x8xf32>
    %38 = vector.extract_strided_slice %37 {offsets = [0, 0], sizes = [8, 8], strides = [1, 1]} : vector<128x8xf32> to vector<8x8xf32>
    %c0_14 = arith.constant 0 : index
    %c0_15 = arith.constant 0 : index
    %39 = vector.load %arg3[%c0_14, %c0_15] : memref<8x8xf32, #tpu.memory_space<vmem>>, vector<8x8xf32>
    tpu.vector_store %arg3[%c0_14, %c0_15], %38 {strides = array<i32>} : memref<8x8xf32, #tpu.memory_space<vmem>>, vector<8x8xf32>,
    return
  }
  func.func @transform_0(%arg0: i32) -> (i32, i32) {
    %c0_i32 = arith.constant 0 : i32
    %c0_i32_0 = arith.constant 0 : i32
    return %arg0, %c0_i32 : i32, i32
  }
  func.func @transform_1(%arg0: i32) -> (i32, i32) {
    %c0_i32 = arith.constant 0 : i32
    %c0_i32_0 = arith.constant 0 : i32
    %c0_i32_1 = arith.constant 0 : i32
    return %c0_i32, %c0_i32_0 : i32, i32
  }
  func.func @transform_2(%arg0: i32) -> (i32, i32) {
    %c0_i32 = arith.constant 0 : i32
    %c0_i32_0 = arith.constant 0 : i32
    return %c0_i32, %arg0 : i32, i32
  }
}

</mosaic_0001>

<llo_original>
// kernel: actor_forward.1
$region0: #{actor_forward.1}
  #allocation0 [shape = 'u32[]', space=smem, size = 0x4, offset = 0x4, fixed_abs, tag = 'smem constant byte address 0x4 - core index']
  #allocation1 [shape = 'u32[144,128]{1,0:T(1,128)}', space=vmem, size = 0x12000, scoped, tag = 'internal scratch']
  %s0 = inlined_call_operand.hbm [shape: f32[8,16], index: 0, kind: input, shape index: {}]
  %s1 = inlined_call_operand.hbm [shape: bf16[320,128], index: 1, kind: input, shape index: {}]
  %s2 = inlined_call_operand.vmem [shape: f32[8,8], index: 2, kind: output, shape index: {}]
  %s3 = sld [smem:[#allocation0]]
  $region26: #{actor_forward.1} parent=0
    _
  %s5 = ssub.s32 1, %s3
  %s6 = scalar_select 0, %s5, %s3
  $region1: #{actor_forward.1} parent=0
    #allocation2 [shape = 'u8[4096]{0}', space=vmem, size = 0x1000, scoped, tag = 'input window, operand 0, single buffered']
    #allocation3 [shape = 's32[1]{0}', space=sflag, size = 0x4, scoped, tag = 'scoped memory for actor_forward.1']
    #allocation4 [shape = 'u8[81920]{0}', space=vmem, size = 0x14000, scoped, tag = 'input window, operand 1, single buffered']
    #allocation5 [shape = 's32[1]{0}', space=sflag, size = 0x4, scoped, tag = 'scoped memory for actor_forward.1']
    %7 = vsyncpa [#allocation3], 0
    %8 = vsyncpa [#allocation5], 0
    // Predicated region
    $region2: #{actor_forward.1} parent=1 // pred_check
      _
    $region3: #{actor_forward.1} parent=1 // pred_check_branch
      %10 = sbr.rel (0) target = $region5
    $region4: #{actor_forward.1} parent=1 // pred_region
      %s12 = ssub.s32 128, 128
      %13 = vsyncadd [#allocation3], %s12
      %s15 = sshll.u32 [#allocation2], 4
      %s16 = int_to_ptr.vmem [resolvable:$true] %s15
      %18 = dma.hbm_to_vmem [thread:$0]  %s0, 128, %s16, [#allocation3]
    $region5: #{actor_forward.1} parent=1 // pred_fallthru
      _
    // Predicated region
    $region6: #{actor_forward.1} parent=1 // pred_check
      _
    $region7: #{actor_forward.1} parent=1 // pred_check_branch
      %20 = sbr.rel (0) target = $region9
    $region8: #{actor_forward.1} parent=1 // pred_region
      %s22 = ssub.s32 2560, 2560
      %23 = vsyncadd [#allocation5], %s22
      %s24 = sshll.u32 [#allocation4], 4
      %s25 = int_to_ptr.vmem [resolvable:$true] %s24
      %30 = dma.hbm_to_vmem [thread:$0]  %s1, 2560, %s25, [#allocation5], 64, 64, 4
    $region9: #{actor_forward.1} parent=1 // pred_fallthru
      _
    // Predicated region
    $region10: #{actor_forward.1} parent=1 // pred_check
      _
    $region11: #{actor_forward.1} parent=1 // pred_check_branch
      %32 = sbr.rel (0) target = $region13
    $region12: #{actor_forward.1} parent=1 // pred_region
      %33 = dma.done [#allocation3], 128
    $region13: #{actor_forward.1} parent=1 // pred_fallthru
      _
    // Predicated region
    $region14: #{actor_forward.1} parent=1 // pred_check
      _
    $region15: #{actor_forward.1} parent=1 // pred_check_branch
      %35 = sbr.rel (0) target = $region17
    $region16: #{actor_forward.1} parent=1 // pred_region
      %36 = dma.done [#allocation5], 2560
    $region17: #{actor_forward.1} parent=1 // pred_fallthru
      _
    %v37 = vld [vmem:[#allocation2] sm:$0xff]
    %v38 = vld [vmem:[#allocation4] sm:$0xf]
    %v39 = vld [vmem:[#allocation4 + $0x4] sm:$0xf]
    %v40 = vunpack.c.l.bf16 %v38
    %v41 = vunpack.c.l.bf16 %v39
    %v42 = vld [vmem:[#allocation4 + $0x8] sm:$0x1]
    %v43 = vunpack.c.l.bf16 %v42
    %v44 = vlaneseq
    %v45 = vshrl.u32 %v44, 7
    %v46 = vsub.s32 0, %v45
    %v47 = vrot.slane %v43, %v46
    %vm48 = vcmask 130048
    %v50 = vsel %vm48, %v37, 0
    %52 = vmatprep.subr.mxu0 0.0
    %53 = vmatpush1.msra.mxu0 %v40
    %54 = vmatprep.subr.mxu0 0.0
    %55 = vmatpush1.msra.mxu0 %v41
    %56 = vmatprep.subr.mxu0 0.0
    %57 = vmatpush1.msra.mxu0 0.0
    %58 = vmatprep.subr.mxu0 0.0
    %59 = vmatpush1.msra.mxu0 0.0
    %60 = vmatprep.subr.mxu0 0.0
    %61 = vmatpush1.msra.mxu0 0.0
    %62 = vmatprep.subr.mxu0 0.0
    %63 = vmatpush1.msra.mxu0 0.0
    %64 = vmatprep.subr.mxu0 0.0
    %65 = vmatpush1.msra.mxu0 0.0
    %66 = vmatprep.subr.mxu0 0.0
    %67 = vmatpush1.msra.mxu0 0.0
    %68 = vmatprep.subr.mxu0 0.0
    %69 = vmatpush1.msra.mxu0 0.0
    %70 = vmatprep.subr.mxu0 0.0
    %71 = vmatpush1.msra.mxu0 0.0
    %72 = vmatprep.subr.mxu0 0.0
    %73 = vmatpush1.msra.mxu0 0.0
    %74 = vmatprep.subr.mxu0 0.0
    %75 = vmatpush1.msra.mxu0 0.0
    %76 = vmatprep.subr.mxu0 0.0
    %77 = vmatpush1.msra.mxu0 0.0
    %78 = vmatprep.subr.mxu0 0.0
    %79 = vmatpush1.msra.mxu0 0.0
    %80 = vmatprep.subr.mxu0 0.0
    %81 = vmatpush1.msra.mxu0 0.0
    %82 = vmatprep.subr.mxu0 0.0
    %83 = vmatpush1.msra.mxu0 0.0
    %84 = vmatprep.subr.mxu0 0.0
    %85 = vmatpush1.msra.mxu0 0.0
    %86 = vmatprep.subr.mxu0 0.0
    %87 = vmatpush1.msra.mxu0 0.0
    %88 = vmatprep.subr.mxu0 0.0
    %89 = vmatpush1.msra.mxu0 0.0
    %90 = vmatprep.subr.mxu0 0.0
    %91 = vmatpush1.msra.mxu0 0.0
    %92 = vmatprep.subr.mxu0 0.0
    %93 = vmatpush1.msra.mxu0 0.0
    %94 = vmatprep.subr.mxu0 0.0
    %95 = vmatpush1.msra.mxu0 0.0
    %96 = vmatprep.subr.mxu0 0.0
    %97 = vmatpush1.msra.mxu0 0.0
    %98 = vmatprep.subr.mxu0 0.0
    %99 = vmatpush1.msra.mxu0 0.0
    %100 = vmatprep.subr.mxu0 0.0
    %101 = vmatpush1.msra.mxu0 0.0
    %102 = vmatprep.subr.mxu0 0.0
    %103 = vmatpush1.msra.mxu0 0.0
    %104 = vmatprep.subr.mxu0 0.0
    %105 = vmatpush1.msra.mxu0 0.0
    %106 = vmatprep.subr.mxu0 0.0
    %107 = vmatpush1.msra.mxu0 0.0
    %108 = vmatprep.subr.mxu0 0.0
    %109 = vmatpush1.msra.mxu0 0.0
    %110 = vmatprep.subr.mxu0 0.0
    %111 = vmatpush1.msra.mxu0 0.0
    %112 = vmatprep.subr.mxu0 0.0
    %113 = vmatpush1.msra.mxu0 0.0
    %114 = vmatprep.subr.mxu0 0.0
    %115 = vmatpush1.msra.mxu0 0.0
    %116 = vmatprep.mubr.f32.mxu0 0.0
    %117 = vmatmul.mubr.f32.gmra.mrb[0].mxu0 %v50
    %v118 = vpop.f32.mrb[0].mxu0
    %v119 = vadd.f32 %v47, %v118
    %v120 = vpop.f32.mrb[0].mxu0
    %121 = vdwg.mxu0
    %v122 = vmax.f32 %v119, 0.0
    %v123 = vld [vmem:[#allocation4 + $0x10] sm:$0xf]
    %v124 = vld [vmem:[#allocation4 + $0x14] sm:$0xf]
    %v125 = vld [vmem:[#allocation4 + $0x18] sm:$0xf]
    %v126 = vld [vmem:[#allocation4 + $0x1c] sm:$0xf]
    %v127 = vld [vmem:[#allocation4 + $0x20] sm:$0xf]
    %v128 = vld [vmem:[#allocation4 + $0x24] sm:$0xf]
    %v129 = vld [vmem:[#allocation4 + $0x28] sm:$0xf]
    %v130 = vld [vmem:[#allocation4 + $0x2c] sm:$0xf]
    %v131 = vld [vmem:[#allocation4 + $0x30] sm:$0xf]
    %v132 = vld [vmem:[#allocation4 + $0x34] sm:$0xf]
    %v133 = vld [vmem:[#allocation4 + $0x38] sm:$0xf]
    %v134 = vld [vmem:[#allocation4 + $0x3c] sm:$0xf]
    %v135 = vld [vmem:[#allocation4 + $0x40] sm:$0xf]
    %v136 = vld [vmem:[#allocation4 + $0x44] sm:$0xf]
    %v137 = vld [vmem:[#allocation4 + $0x48] sm:$0xf]
    %v138 = vld [vmem:[#allocation4 + $0x4c] sm:$0xf]
    %v139 = vunpack.c.l.bf16 %v123
    %v140 = vunpack.c.l.bf16 %v124
    %v141 = vunpack.c.l.bf16 %v125
    %v142 = vunpack.c.l.bf16 %v126
    %v143 = vunpack.c.l.bf16 %v127
    %v144 = vunpack.c.l.bf16 %v128
    %v145 = vunpack.c.l.bf16 %v129
    %v146 = vunpack.c.l.bf16 %v130
    %v147 = vunpack.c.l.bf16 %v131
    %v148 = vunpack.c.l.bf16 %v132
    %v149 = vunpack.c.l.bf16 %v133
    %v150 = vunpack.c.l.bf16 %v134
    %v151 = vunpack.c.l.bf16 %v135
    %v152 = vunpack.c.l.bf16 %v136
    %v153 = vunpack.c.l.bf16 %v137
    %v154 = vunpack.c.l.bf16 %v138
    %v155 = vld [vmem:[#allocation4 + $0x50] sm:$0x1]
    %v156 = vunpack.c.l.bf16 %v155
    %v157 = vlaneseq
    %v158 = vshrl.u32 %v157, 7
    %v159 = vsub.s32 0, %v158
    %v160 = vrot.slane %v156, %v159
    %161 = vmatprep.subr.mxu0 0.0
    %162 = vmatpush1.msra.mxu0 %v139
    %163 = vmatprep.subr.mxu0 0.0
    %164 = vmatpush1.msra.mxu0 %v140
    %165 = vmatprep.subr.mxu0 0.0
    %166 = vmatpush1.msra.mxu0 %v141
    %167 = vmatprep.subr.mxu0 0.0
    %168 = vmatpush1.msra.mxu0 %v142
    %169 = vmatprep.subr.mxu0 0.0
    %170 = vmatpush1.msra.mxu0 %v143
    %171 = vmatprep.subr.mxu0 0.0
    %172 = vmatpush1.msra.mxu0 %v144
    %173 = vmatprep.subr.mxu0 0.0
    %174 = vmatpush1.msra.mxu0 %v145
    %175 = vmatprep.subr.mxu0 0.0
    %176 = vmatpush1.msra.mxu0 %v146
    %177 = vmatprep.subr.mxu0 0.0
    %178 = vmatpush1.msra.mxu0 %v147
    %179 = vmatprep.subr.mxu0 0.0
    %180 = vmatpush1.msra.mxu0 %v148
    %181 = vmatprep.subr.mxu0 0.0
    %182 = vmatpush1.msra.mxu0 %v149
    %183 = vmatprep.subr.mxu0 0.0
    %184 = vmatpush1.msra.mxu0 %v150
    %185 = vmatprep.subr.mxu0 0.0
    %186 = vmatpush1.msra.mxu0 %v151
    %187 = vmatprep.subr.mxu0 0.0
    %188 = vmatpush1.msra.mxu0 %v152
    %189 = vmatprep.subr.mxu0 0.0
    %190 = vmatpush1.msra.mxu0 %v153
    %191 = vmatprep.subr.mxu0 0.0
    %192 = vmatpush1.msra.mxu0 %v154
    %193 = vmatprep.subr.mxu0 0.0
    %194 = vmatpush1.msra.mxu0 0.0
    %195 = vmatprep.subr.mxu0 0.0
    %196 = vmatpush1.msra.mxu0 0.0
    %197 = vmatprep.subr.mxu0 0.0
    %198 = vmatpush1.msra.mxu0 0.0
    %199 = vmatprep.subr.mxu0 0.0
    %200 = vmatpush1.msra.mxu0 0.0
    %201 = vmatprep.subr.mxu0 0.0
    %202 = vmatpush1.msra.mxu0 0.0
    %203 = vmatprep.subr.mxu0 0.0
    %204 = vmatpush1.msra.mxu0 0.0
    %205 = vmatprep.subr.mxu0 0.0
    %206 = vmatpush1.msra.mxu0 0.0
    %207 = vmatprep.subr.mxu0 0.0
    %208 = vmatpush1.msra.mxu0 0.0
    %209 = vmatprep.subr.mxu0 0.0
    %210 = vmatpush1.msra.mxu0 0.0
    %211 = vmatprep.subr.mxu0 0.0
    %212 = vmatpush1.msra.mxu0 0.0
    %213 = vmatprep.subr.mxu0 0.0
    %214 = vmatpush1.msra.mxu0 0.0
    %215 = vmatprep.subr.mxu0 0.0
    %216 = vmatpush1.msra.mxu0 0.0
    %217 = vmatprep.subr.mxu0 0.0
    %218 = vmatpush1.msra.mxu0 0.0
    %219 = vmatprep.subr.mxu0 0.0
    %220 = vmatpush1.msra.mxu0 0.0
    %221 = vmatprep.subr.mxu0 0.0
    %222 = vmatpush1.msra.mxu0 0.0
    %223 = vmatprep.subr.mxu0 0.0
    %224 = vmatpush1.msra.mxu0 0.0
    %225 = vmatprep.mubr.f32.mxu0 0.0
    %226 = vmatmul.mubr.f32.gmra.mrb[0].mxu0 %v122
    %v227 = vpop.f32.mrb[0].mxu0
    %v228 = vadd.f32 %v160, %v227
    %v229 = vpop.f32.mrb[0].mxu0
    %230 = vdwg.mxu0
    %v231 = vmax.f32 %v228, 0.0
    %v232 = vld [vmem:[#allocation4 + $0x58] sm:$0xf]
    %v233 = vld [vmem:[#allocation4 + $0x5c] sm:$0xf]
    %v234 = vld [vmem:[#allocation4 + $0x60] sm:$0xf]
    %v235 = vld [vmem:[#allocation4 + $0x64] sm:$0xf]
    %v236 = vld [vmem:[#allocation4 + $0x68] sm:$0xf]
    %v237 = vld [vmem:[#allocation4 + $0x6c] sm:$0xf]
    %v238 = vld [vmem:[#allocation4 + $0x70] sm:$0xf]
    %v239 = vld [vmem:[#allocation4 + $0x74] sm:$0xf]
    %v240 = vld [vmem:[#allocation4 + $0x78] sm:$0xf]
    %v241 = vld [vmem:[#allocation4 + $0x7c] sm:$0xf]
    %v242 = vld [vmem:[#allocation4 + $0x80] sm:$0xf]
    %v243 = vld [vmem:[#allocation4 + $0x84] sm:$0xf]
    %v244 = vld [vmem:[#allocation4 + $0x88] sm:$0xf]
    %v245 = vld [vmem:[#allocation4 + $0x8c] sm:$0xf]
    %v246 = vld [vmem:[#allocation4 + $0x90] sm:$0xf]
    %v247 = vld [vmem:[#allocation4 + $0x94] sm:$0xf]
    %v248 = vunpack.c.l.bf16 %v232
    %v249 = vunpack.c.l.bf16 %v233
    %v250 = vunpack.c.l.bf16 %v234
    %v251 = vunpack.c.l.bf16 %v235
    %v252 = vunpack.c.l.bf16 %v236
    %v253 = vunpack.c.l.bf16 %v237
    %v254 = vunpack.c.l.bf16 %v238
    %v255 = vunpack.c.l.bf16 %v239
    %v256 = vunpack.c.l.bf16 %v240
    %v257 = vunpack.c.l.bf16 %v241
    %v258 = vunpack.c.l.bf16 %v242
    %v259 = vunpack.c.l.bf16 %v243
    %v260 = vunpack.c.l.bf16 %v244
    %v261 = vunpack.c.l.bf16 %v245
    %v262 = vunpack.c.l.bf16 %v246
    %v263 = vunpack.c.l.bf16 %v247
    %v264 = vld [vmem:[#allocation4 + $0x98] sm:$0x1]
    %v265 = vunpack.c.l.bf16 %v264
    %v266 = vlaneseq
    %v267 = vshrl.u32 %v266, 7
    %v268 = vsub.s32 0, %v267
    %v269 = vrot.slane %v265, %v268
    %270 = vmatprep.subr.mxu0 0.0
    %271 = vmatpush1.msra.mxu0 %v248
    %272 = vmatprep.subr.mxu0 0.0
    %273 = vmatpush1.msra.mxu0 %v249
    %274 = vmatprep.subr.mxu0 0.0
    %275 = vmatpush1.msra.mxu0 %v250
    %276 = vmatprep.subr.mxu0 0.0
    %277 = vmatpush1.msra.mxu0 %v251
    %278 = vmatprep.subr.mxu0 0.0
    %279 = vmatpush1.msra.mxu0 %v252
    %280 = vmatprep.subr.mxu0 0.0
    %281 = vmatpush1.msra.mxu0 %v253
    %282 = vmatprep.subr.mxu0 0.0
    %283 = vmatpush1.msra.mxu0 %v254
    %284 = vmatprep.subr.mxu0 0.0
    %285 = vmatpush1.msra.mxu0 %v255
    %286 = vmatprep.subr.mxu0 0.0
    %287 = vmatpush1.msra.mxu0 %v256
    %288 = vmatprep.subr.mxu0 0.0
    %289 = vmatpush1.msra.mxu0 %v257
    %290 = vmatprep.subr.mxu0 0.0
    %291 = vmatpush1.msra.mxu0 %v258
    %292 = vmatprep.subr.mxu0 0.0
    %293 = vmatpush1.msra.mxu0 %v259
    %294 = vmatprep.subr.mxu0 0.0
    %295 = vmatpush1.msra.mxu0 %v260
    %296 = vmatprep.subr.mxu0 0.0
    %297 = vmatpush1.msra.mxu0 %v261
    %298 = vmatprep.subr.mxu0 0.0
    %299 = vmatpush1.msra.mxu0 %v262
    %300 = vmatprep.subr.mxu0 0.0
    %301 = vmatpush1.msra.mxu0 %v263
    %302 = vmatprep.subr.mxu0 0.0
    %303 = vmatpush1.msra.mxu0 0.0
    %304 = vmatprep.subr.mxu0 0.0
    %305 = vmatpush1.msra.mxu0 0.0
    %306 = vmatprep.subr.mxu0 0.0
    %307 = vmatpush1.msra.mxu0 0.0
    %308 = vmatprep.subr.mxu0 0.0
    %309 = vmatpush1.msra.mxu0 0.0
    %310 = vmatprep.subr.mxu0 0.0
    %311 = vmatpush1.msra.mxu0 0.0
    %312 = vmatprep.subr.mxu0 0.0
    %313 = vmatpush1.msra.mxu0 0.0
    %314 = vmatprep.subr.mxu0 0.0
    %315 = vmatpush1.msra.mxu0 0.0
    %316 = vmatprep.subr.mxu0 0.0
    %317 = vmatpush1.msra.mxu0 0.0
    %318 = vmatprep.subr.mxu0 0.0
    %319 = vmatpush1.msra.mxu0 0.0
    %320 = vmatprep.subr.mxu0 0.0
    %321 = vmatpush1.msra.mxu0 0.0
    %322 = vmatprep.subr.mxu0 0.0
    %323 = vmatpush1.msra.mxu0 0.0
    %324 = vmatprep.subr.mxu0 0.0
    %325 = vmatpush1.msra.mxu0 0.0
    %326 = vmatprep.subr.mxu0 0.0
    %327 = vmatpush1.msra.mxu0 0.0
    %328 = vmatprep.subr.mxu0 0.0
    %329 = vmatpush1.msra.mxu0 0.0
    %330 = vmatprep.subr.mxu0 0.0
    %331 = vmatpush1.msra.mxu0 0.0
    %332 = vmatprep.subr.mxu0 0.0
    %333 = vmatpush1.msra.mxu0 0.0
    %334 = vmatprep.mubr.f32.mxu0 0.0
    %335 = vmatmul.mubr.f32.gmra.mrb[0].mxu0 %v231
    %v336 = vpop.f32.mrb[0].mxu0
    %v337 = vadd.f32 %v269, %v336
    %v338 = vpop.f32.mrb[0].mxu0
    %339 = vdwg.mxu0
    %v340 = vlaneseq
    %v341 = vand.u32 %v340, 127
    %vm342 = vcmp.ge.s32.totalorder %v341, 4
    %vm343 = vcmp.lt.s32.totalorder %v341, 8
    %vm344 = vmand %vm342, %vm343
    %v345 = vmax.f32 %v337, -20.0
    %v346 = vmin.f32 %v345, 2.0
    %v347 = vsel %vm344, %v346, %v337
    %348 = vxpose.xlu0.b32.start [1/16] %v347, 128
    %349 = vxpose.xlu0.b32.cont [2/16] 0.0, 128
    %350 = vxpose.xlu0.b32.cont [3/16] 0.0, 128
    %351 = vxpose.xlu0.b32.cont [4/16] 0.0, 128
    %352 = vxpose.xlu0.b32.cont [5/16] 0.0, 128
    %353 = vxpose.xlu0.b32.cont [6/16] 0.0, 128
    %354 = vxpose.xlu0.b32.cont [7/16] 0.0, 128
    %355 = vxpose.xlu0.b32.cont [8/16] 0.0, 128
    %356 = vxpose.xlu0.b32.cont [9/16] 0.0, 128
    %357 = vxpose.xlu0.b32.cont [10/16] 0.0, 128
    %358 = vxpose.xlu0.b32.cont [11/16] 0.0, 128
    %359 = vxpose.xlu0.b32.cont [12/16] 0.0, 128
    %360 = vxpose.xlu0.b32.cont [13/16] 0.0, 128
    %361 = vxpose.xlu0.b32.cont [14/16] 0.0, 128
    %362 = vxpose.xlu0.b32.cont [15/16] 0.0, 128
    %363 = vxpose.xlu0.b32.end [16/16] 0.0, 128
    %v364 = vpop.trf.xlu0
    %v365 = vpop.trf.xlu0
    %v366 = vpop.trf.xlu0
    %v367 = vpop.trf.xlu0
    %v368 = vpop.trf.xlu0
    %v369 = vpop.trf.xlu0
    %v370 = vpop.trf.xlu0
    %v371 = vpop.trf.xlu0
    %v372 = vpop.trf.xlu0
    %v373 = vpop.trf.xlu0
    %v374 = vpop.trf.xlu0
    %v375 = vpop.trf.xlu0
    %v376 = vpop.trf.xlu0
    %v377 = vpop.trf.xlu0
    %v378 = vpop.trf.xlu0
    %v379 = vpop.trf.xlu0
    %vm380 = vcmask 64512
    %381 = vst.msk [vmem:[%s2] sm:$0xff] %vm380, %v364
    // Predicated region
    $region18: #{actor_forward.1} parent=1 // pred_check
      _
    $region19: #{actor_forward.1} parent=1 // pred_check_branch
      %383 = sbr.rel (0) target = $region21
    $region20: #{actor_forward.1} parent=1 // pred_region
      _
    $region21: #{actor_forward.1} parent=1 // pred_fallthru
      _
    // Predicated region
    $region22: #{actor_forward.1} parent=1 // pred_check
      _
    $region23: #{actor_forward.1} parent=1 // pred_check_branch
      %385 = sbr.rel (0) target = $region25
    $region24: #{actor_forward.1} parent=1 // pred_region
      _
    $region25: #{actor_forward.1} parent=1 // pred_fallthru
      _
    %386 = vsyncpa [#allocation3], 1
    %387 = vsyncpa [#allocation5], 1

</llo_original>
